<compile_context>
chip_gen: v6e
topology: v6e:2x2x1
jax: 0.10.0
libtpu: 0.0.40
codegen_flags: <defaults>
</compile_context>

<pallas_src>
import functools

import jax
import jax.numpy as jnp
from jax import lax
from jax.experimental import pallas as pl
from jax.experimental.pallas import tpu as pltpu

LANE = 128                      # vreg lane width

# Hash constants (as int32 two's-complement values).
_GOLD = 0x9E3779B9 - (1 << 32)  # Weyl increment
_C1 = 0x85EBCA6B - (1 << 32)    # murmur3 fmix32
_C2 = 0xC2B2AE35 - (1 << 32)    # murmur3 fmix32


def _dropout_kernel(seed_ref, x_ref, o_ref, *, dropout_rate, block_rows):
    # seed_ref: SMEM (1,) int32 (scalar-prefetched base seed)
    # x_ref:    VMEM (block_rows, 128) input tile
    # o_ref:    VMEM (block_rows, 128) output tile
    shape = x_ref.shape

    # Global element index of every lane in this tile (tiling-independent).
    row = lax.broadcasted_iota(jnp.int32, shape, 0)
    lane = lax.broadcasted_iota(jnp.int32, shape, 1)
    idx = (pl.program_id(0) * jnp.int32(block_rows) + row) * jnp.int32(LANE) + lane

    # Counter-based hash PRNG: Weyl step + murmur3 fmix32 (int32 wraps, logical
    # shifts). Pure VPU ops -> lowers on TPU and in interpret mode.
    h = idx * jnp.int32(_GOLD) + seed_ref[0]
    h = h ^ lax.shift_right_logical(h, 16)
    h = h * jnp.int32(_C1)
    h = h ^ lax.shift_right_logical(h, 13)
    h = h * jnp.int32(_C2)
    h = h ^ lax.shift_right_logical(h, 16)

    # Integer-threshold Bernoulli: keep with prob (2^24 - round(p*2^24)) / 2^24
    # (quantization error <= 2^-24 in the keep probability).
    threshold = jnp.int32(int(round(dropout_rate * (1 << 24))))
    keep = (h & jnp.int32(0x00FFFFFF)) >= threshold

    # Dtype-native compute (no f32 upcast for bf16/f16 inputs).
    xv = x_ref[...]
    scale = jnp.asarray(1.0 / (1.0 - dropout_rate), dtype=xv.dtype)
    o_ref[...] = jnp.where(keep, xv * scale, jnp.zeros_like(xv))


def dropout_forward(x, dropout_rate, seed, *, training=True, block_rows=None):
    """Dropout forward pass. x: any shape/float dtype. Returns same shape/dtype."""
    if not training or dropout_rate == 0.0:
        return x
    assert 0.0 <= dropout_rate < 1.0, "dropout_rate must be in [0, 1)"

    orig_shape = x.shape
    n = x.size
    itemsize = jnp.dtype(x.dtype).itemsize

    # Native packed tile: (sublane, 128); sublane scales with packing factor.
    sublane = 8 * max(1, 4 // itemsize)
    tile_elems = sublane * LANE

    if n % tile_elems == 0:
        # Fast path: lane-dense reshape, no pad / no tail slice (no extra HBM passes).
        rows = n // LANE
        x2d = x.reshape(rows, LANE)
        pad = 0
    else:
        padded = pl.cdiv(n, tile_elems) * tile_elems
        pad = padded - n
        x2d = jnp.pad(x.reshape(-1), (0, pad)).reshape(padded // LANE, LANE)
        rows = padded // LANE

    # ~1 MiB per buffer per grid step (2048 rows f32 / 4096 rows bf16); with
    # double-buffered in+out this stays <= 4 MiB of VMEM on every generation
    # while amortizing the per-step overhead.
    if block_rows is None:
        block_rows = (1 << 20) // (LANE * itemsize)
    block_rows = max(sublane, min(block_rows, rows))
    block_rows = (block_rows // sublane) * sublane

    grid = (pl.cdiv(rows, block_rows),)
    seed_arr = jnp.asarray([seed], dtype=jnp.int32)
    kernel = functools.partial(
        _dropout_kernel,
        dropout_rate=float(dropout_rate),
        block_rows=int(block_rows),
    )

    out2d = pl.pallas_call(
        kernel,
        out_shape=jax.ShapeDtypeStruct((rows, LANE), x.dtype),
        grid_spec=pltpu.PrefetchScalarGridSpec(
            num_scalar_prefetch=1,                       # seed -> SMEM
            grid=grid,
            in_specs=[
                pl.BlockSpec((block_rows, LANE), lambda i, seed_ref: (i, 0)),
            ],
            out_specs=pl.BlockSpec((block_rows, LANE), lambda i, seed_ref: (i, 0)),
        ),
        compiler_params=pltpu.CompilerParams(
            dimension_semantics=("parallel",),           # independent tiles (v7x 2-TC)
        ),
    )(seed_arr, x2d)

    if pad:
        return out2d.reshape(-1)[:n].reshape(orig_shape)
    return out2d.reshape(orig_shape)


if __name__ == "__main__":
    dropout_rate = 0.1
    B, C, H, W = 2, 4, 16, 16

    key = jax.random.PRNGKey(0)
    x = jax.random.normal(key, (B, C, H, W), dtype=jnp.float32)

    # Training-mode forward (runs the Pallas kernel).
    out = dropout_forward(x, dropout_rate, seed=42, training=True)
    out = jax.block_until_ready(out)
    assert out.shape == x.shape and out.dtype == x.dtype

    # Every element must be either dropped (0) or kept-and-scaled by 1/(1-p).
    scale = jnp.float32(1.0 / (1.0 - dropout_rate))
    scaled = x * scale
    is_zero = jnp.isclose(out, 0.0)
    is_scaled = jnp.isclose(out, scaled, rtol=1e-5, atol=1e-6)
    assert bool(jnp.all(is_zero | is_scaled)), "values must be 0 or x/(1-p)"

    # Empirical keep fraction should be close to 1 - p (ignore x ~ 0 entries).
    kept = jnp.where(jnp.abs(x) > 1e-6, (~is_zero).astype(jnp.float32), 1.0)
    keep_frac = float(jnp.mean(kept))
    assert abs(keep_frac - (1.0 - dropout_rate)) < 0.06, f"keep_frac={keep_frac}"

    # Eval-mode forward is the identity.
    out_eval = dropout_forward(x, dropout_rate, seed=42, training=False)
    assert bool(jnp.all(out_eval == x))

    print("KERNEL_OK")
</pallas_src>

<mosaic_0001>
module attributes {stable_mosaic.version = 11 : i64} {
  func.func @_dropout_kernel(%arg0: i32, %arg1: memref<1xi32, #tpu.memory_space<smem>>, %arg2: memref<16x128xf32, #tpu.memory_space<vmem>>, %arg3: memref<16x128xf32, #tpu.memory_space<vmem>>) attributes {dimension_semantics = [#tpu.dimension_semantics<parallel>], iteration_bounds = array<i64: 1>, scalar_prefetch = 1 : i64, scratch_operands = 0 : i64, tpu.core_type = #tpu.core_type<tc>, window_params = [{transform_indices = @transform_0, window_bounds = array<i64: 16, 128>}, {transform_indices = @transform_1, window_bounds = array<i64: 16, 128>}]} {
    %0 = tpu.iota {dimensions = array<i32: 0>} : vector<16x128xi32>
    %1 = tpu.iota {dimensions = array<i32: 1>} : vector<16x128xi32>
    %c16_i32 = arith.constant 16 : i32
    %2 = arith.muli %arg0, %c16_i32 : i32
    %3 = vector.broadcast %2 : i32 to vector<16x128xi32>
    %4 = arith.addi %3, %0 : vector<16x128xi32>
    %c128_i32 = arith.constant 128 : i32
    %5 = vector.broadcast %c128_i32 : i32 to vector<16x128xi32>
    %6 = arith.muli %4, %5 : vector<16x128xi32>
    %7 = arith.addi %6, %1 : vector<16x128xi32>
    %c-1640531527_i32 = arith.constant -1640531527 : i32
    %8 = vector.broadcast %c-1640531527_i32 : i32 to vector<16x128xi32>
    %9 = arith.muli %7, %8 : vector<16x128xi32>
    %c0 = arith.constant 0 : index
    %10 = memref.load %arg1[%c0] : memref<1xi32, #tpu.memory_space<smem>>
    %11 = vector.broadcast %10 : i32 to vector<16x128xi32>
    %12 = arith.addi %9, %11 : vector<16x128xi32>
    %c16_i32_0 = arith.constant 16 : i32
    %13 = vector.broadcast %c16_i32_0 : i32 to vector<16x128xi32>
    %14 = arith.shrui %12, %13 : vector<16x128xi32>
    %15 = arith.xori %12, %14 : vector<16x128xi32>
    %c-2048144789_i32 = arith.constant -2048144789 : i32
    %16 = vector.broadcast %c-2048144789_i32 : i32 to vector<16x128xi32>
    %17 = arith.muli %15, %16 : vector<16x128xi32>
    %c13_i32 = arith.constant 13 : i32
    %18 = vector.broadcast %c13_i32 : i32 to vector<16x128xi32>
    %19 = arith.shrui %17, %18 : vector<16x128xi32>
    %20 = arith.xori %17, %19 : vector<16x128xi32>
    %c-1028477387_i32 = arith.constant -1028477387 : i32
    %21 = vector.broadcast %c-1028477387_i32 : i32 to vector<16x128xi32>
    %22 = arith.muli %20, %21 : vector<16x128xi32>
    %c16_i32_1 = arith.constant 16 : i32
    %23 = vector.broadcast %c16_i32_1 : i32 to vector<16x128xi32>
    %24 = arith.shrui %22, %23 : vector<16x128xi32>
    %25 = arith.xori %22, %24 : vector<16x128xi32>
    %c16777215_i32 = arith.constant 16777215 : i32
    %26 = vector.broadcast %c16777215_i32 : i32 to vector<16x128xi32>
    %27 = arith.andi %25, %26 : vector<16x128xi32>
    %c1677722_i32 = arith.constant 1677722 : i32
    %28 = vector.broadcast %c1677722_i32 : i32 to vector<16x128xi32>
    %29 = arith.cmpi sge, %27, %28 : vector<16x128xi32>
    %c0_2 = arith.constant 0 : index
    %c0_3 = arith.constant 0 : index
    %30 = vector.load %arg2[%c0_2, %c0_3] : memref<16x128xf32, #tpu.memory_space<vmem>>, vector<16x128xf32>
    %cst = arith.constant 1.11111116 : f32
    %31 = vector.broadcast %cst : f32 to vector<16x128xf32>
    %32 = arith.mulf %30, %31 : vector<16x128xf32>
    %cst_4 = arith.constant 0.000000e+00 : f32
    %33 = vector.broadcast %cst_4 : f32 to vector<16x128xf32>
    %34 = arith.select %29, %32, %33 : vector<16x128xi1>, vector<16x128xf32>
    %c0_5 = arith.constant 0 : index
    %c0_6 = arith.constant 0 : index
    %35 = vector.load %arg3[%c0_5, %c0_6] : memref<16x128xf32, #tpu.memory_space<vmem>>, vector<16x128xf32>
    tpu.vector_store %arg3[%c0_5, %c0_6], %34 {strides = array<i32>} : memref<16x128xf32, #tpu.memory_space<vmem>>, vector<16x128xf32>,
    return
  }
  func.func @transform_0(%arg0: i32, %arg1: memref<1xi32, #tpu.memory_space<smem>>) -> (i32, i32) {
    %c0_i32 = arith.constant 0 : i32
    %c0_i32_0 = arith.constant 0 : i32
    return %arg0, %c0_i32 : i32, i32
  }
  func.func @transform_1(%arg0: i32, %arg1: memref<1xi32, #tpu.memory_space<smem>>) -> (i32, i32) {
    %c0_i32 = arith.constant 0 : i32
    %c0_i32_0 = arith.constant 0 : i32
    return %arg0, %c0_i32 : i32, i32
  }
}

</mosaic_0001>

<llo_original>
// kernel: tpu_custom_call.1
$region0: #{tpu_custom_call.1}
  #allocation0 [shape = 'u32[]', space=smem, size = 0x4, offset = 0x4, fixed_abs, tag = 'smem constant byte address 0x4 - core index']
  #allocation1 [shape = 'u32[144,128]{1,0:T(1,128)}', space=vmem, size = 0x12000, scoped, tag = 'internal scratch']
  #allocation2 [shape = 's32[1]{0}', space=sflag, size = 0x4, scoped, tag = 'scoped memory for tpu_custom_call.1']
  #allocation3 [shape = 's32[1]{0:T(128)S(6)}', space=smem, size = 0x200, scoped, tag = 'prefetched SMEM operand 0']
  %s0 = inlined_call_operand.<no memory space> [shape: s32[1], index: 0, kind: input, shape index: {}]
  %s1 = inlined_call_operand.hbm [shape: f32[16,128], index: 1, kind: input, shape index: {}]
  %s2 = inlined_call_operand.hbm [shape: f32[16,128], index: 2, kind: output, shape index: {}]
  %s3 = sld [smem:[#allocation0]]
  $region18: #{tpu_custom_call.1} parent=0
    _
  %s5 = ssub.s32 1, %s3
  %s6 = scalar_select 0, %s5, %s3
  %7 = sst [smem:[#allocation3]] %s0
  $region1: #{tpu_custom_call.1} parent=0
    #allocation4 [shape = 'u8[8192]{0}', space=vmem, size = 0x2000, scoped, tag = 'input window, operand 1, single buffered']
    #allocation5 [shape = 's32[1]{0}', space=sflag, size = 0x4, scoped, tag = 'scoped memory for tpu_custom_call.1']
    #allocation6 [shape = 's32[1]{0}', space=sflag, size = 0x4, scoped, tag = 'scoped memory for tpu_custom_call.1']
    #allocation7 [shape = 'u8[8192]{0}', space=vmem, size = 0x2000, scoped, tag = 'output window, operand 0, single buffered']
    %8 = vsyncpa [#allocation5], 0
    %9 = vsyncpa [#allocation6], 0
    // Predicated region
    $region2: #{tpu_custom_call.1} parent=1 // pred_check
      _
    $region3: #{tpu_custom_call.1} parent=1 // pred_check_branch
      %11 = sbr.rel (0) target = $region5
    $region4: #{tpu_custom_call.1} parent=1 // pred_region
      %s13 = ssub.s32 256, 256
      %14 = vsyncadd [#allocation5], %s13
      %s15 = sshll.u32 [#allocation4], 4
      %s16 = int_to_ptr.vmem [resolvable:$true] %s15
      %21 = dma.hbm_to_vmem [thread:$0]  %s1, 256, %s16, [#allocation5], 128, 128, 8
    $region5: #{tpu_custom_call.1} parent=1 // pred_fallthru
      _
    // Predicated region
    $region6: #{tpu_custom_call.1} parent=1 // pred_check
      _
    $region7: #{tpu_custom_call.1} parent=1 // pred_check_branch
      %23 = sbr.rel (0) target = $region9
    $region8: #{tpu_custom_call.1} parent=1 // pred_region
      %24 = dma.done [#allocation5], 256
    $region9: #{tpu_custom_call.1} parent=1 // pred_fallthru
      _
    %v25 = vlaneseq
    %v26 = vshrl.u32 %v25, 7
    %v27 = vadd.s32 %v26, 8
    %v28 = vlaneseq
    %v29 = vand.u32 %v28, 127
    %s30 = smul.u32 0, 16
    %v31 = vstv %s30
    %v32 = vadd.s32 %v31, %v26
    %v33 = vadd.s32 %v31, %v27
    %v34 = vmul.u32 %v32, 128
    %v35 = vmul.u32 %v33, 128
    %v36 = vadd.s32 %v34, %v29
    %v37 = vadd.s32 %v35, %v29
    %v38 = vmul.u32 %v36, 2654435769
    %v39 = vmul.u32 %v37, 2654435769
    %s40 = sld [smem:[#allocation3]]
    %v41 = vstv %s40
    %v42 = vadd.s32 %v38, %v41
    %v43 = vadd.s32 %v39, %v41
    %v44 = vshrl.u32 %v42, 16
    %v45 = vshrl.u32 %v43, 16
    %v46 = vxor.u32 %v42, %v44
    %v47 = vxor.u32 %v43, %v45
    %v48 = vmul.u32 %v46, 2246822507
    %v49 = vmul.u32 %v47, 2246822507
    %v50 = vshrl.u32 %v48, 13
    %v51 = vshrl.u32 %v49, 13
    %v52 = vxor.u32 %v48, %v50
    %v53 = vxor.u32 %v49, %v51
    %v54 = vmul.u32 %v52, 3266489909
    %v55 = vmul.u32 %v53, 3266489909
    %v56 = vshrl.u32 %v54, 16
    %v57 = vshrl.u32 %v55, 16
    %v58 = vxor.u32 %v54, %v56
    %v59 = vxor.u32 %v55, %v57
    %v60 = vand.u32 %v58, 16777215
    %v61 = vand.u32 %v59, 16777215
    %vm62 = vcmp.ge.s32.totalorder %v60, 1677722
    %vm63 = vcmp.ge.s32.totalorder %v61, 1677722
    %v64 = vld [vmem:[#allocation4] sm:$0xff]
    %v65 = vld [vmem:[#allocation4 + $0x8] sm:$0xff]
    %v66 = vmul.f32 %v64, 1.1111112
    %v67 = vmul.f32 %v65, 1.1111112
    %v68 = vsel %vm62, %v66, 0.0
    %v69 = vsel %vm63, %v67, 0.0
    %70 = vst [vmem:[#allocation7] sm:$0xff] %v68
    %71 = vst [vmem:[#allocation7 + $0x8] sm:$0xff] %v69
    // Predicated region
    $region10: #{tpu_custom_call.1} parent=1 // pred_check
      _
    $region11: #{tpu_custom_call.1} parent=1 // pred_check_branch
      %73 = sbr.rel (0) target = $region13
    $region12: #{tpu_custom_call.1} parent=1 // pred_region
      %s75 = ssub.s32 256, 256
      %76 = vsyncadd [#allocation6], %s75
      %s77 = sshll.u32 [#allocation7], 4
      %s78 = int_to_ptr.vmem [resolvable:$true] %s77
      %83 = dma.vmem_to_hbm [thread:$0]  %s78, 256, %s2, [#allocation6], 128, 128, 8
    $region13: #{tpu_custom_call.1} parent=1 // pred_fallthru
      _
    // Predicated region
    $region14: #{tpu_custom_call.1} parent=1 // pred_check
      _
    $region15: #{tpu_custom_call.1} parent=1 // pred_check_branch
      %85 = sbr.rel (0) target = $region17
    $region16: #{tpu_custom_call.1} parent=1 // pred_region
      %86 = dma.done [#allocation6], 256
    $region17: #{tpu_custom_call.1} parent=1 // pred_fallthru
      _
    %87 = vsyncpa [#allocation5], 1
    %88 = vsyncpa [#allocation6], 1

</llo_original>
